<compile_context>
chip_gen: v5e
topology: v5e:2x2
jax: 0.10.0
libtpu: 0.0.40
codegen_flags: <defaults>
</compile_context>

<pallas_src>
import jax
import jax.numpy as jnp
from jax import lax
from jax.experimental import pallas as pl
from jax.experimental.pallas import tpu as pltpu


def _linear_add_relu_kernel(x_ref, w_ref, b_ref, other_ref, o_ref):
    # x: (B, IN), w: (OUT, IN) — contract IN with IN, MXU with f32 accumulation.
    acc = lax.dot_general(
        x_ref[...],
        w_ref[...],
        dimension_numbers=(((1,), (1,)), ((), ())),
        preferred_element_type=jnp.float32,
    )
    # VPU elementwise: + bias (broadcast row) + other, then ReLU.
    # other_ref aliases o_ref; it is read fully before o_ref is written.
    acc = acc + b_ref[...] + other_ref[...]
    o_ref[...] = jnp.maximum(acc, 0.0).astype(o_ref.dtype)


def linear_add_relu(x, weight, bias, other):
    """relu(x @ weight.T + bias + other) — matches the PyTorch Model.forward."""
    B, IN = x.shape
    OUT = weight.shape[0]
    b2d = bias.reshape(1, OUT)  # broadcast row (metadata-only reshape)

    vmem = pl.BlockSpec(memory_space=pltpu.MemorySpace.VMEM)

    return pl.pallas_call(
        _linear_add_relu_kernel,
        out_shape=jax.ShapeDtypeStruct((B, OUT), x.dtype),
        in_specs=[vmem, vmem, vmem, vmem],   # whole arrays, no blocking/grid
        out_specs=vmem,
        input_output_aliases={3: 0},         # `other` buffer reused for the output
    )(x, weight, b2d, other)


if __name__ == "__main__":
    key = jax.random.PRNGKey(0)
    k_x, k_other, k_w, k_b = jax.random.split(key, 4)

    B, IN, OUT = 2, 32, 16
    x = jax.random.normal(k_x, (B, IN), dtype=jnp.float32)
    other = jax.random.normal(k_other, (B, OUT), dtype=jnp.float32)

    # Deterministic parameter init (mimics nn.Linear uniform(-1/sqrt(IN), 1/sqrt(IN))).
    bound = 1.0 / (IN ** 0.5)
    weight = jax.random.uniform(k_w, (OUT, IN), minval=-bound, maxval=bound,
                                dtype=jnp.float32)
    bias = jax.random.uniform(k_b, (OUT,), minval=-bound, maxval=bound,
                              dtype=jnp.float32)

    # Reference computed BEFORE the kernel call (the kernel aliases/donates `other`).
    ref = jnp.maximum(x @ weight.T + bias + other, 0.0)
    ref = jax.block_until_ready(ref)

    out = linear_add_relu(x, weight, bias, other)
    out = jax.block_until_ready(out)

    assert out.shape == (B, OUT)
    assert jnp.allclose(out, ref, atol=1e-5, rtol=1e-5)

    print("KERNEL_OK")
</pallas_src>

<mosaic_0001>
module attributes {stable_mosaic.version = 11 : i64} {
  func.func @_linear_add_relu_kernel(%arg0: memref<2x32xf32, #tpu.memory_space<vmem>>, %arg1: memref<16x32xf32, #tpu.memory_space<vmem>>, %arg2: memref<1x16xf32, #tpu.memory_space<vmem>>, %arg3: memref<2x16xf32, #tpu.memory_space<vmem>>, %arg4: memref<2x16xf32, #tpu.memory_space<vmem>>) attributes {dimension_semantics = [], scalar_prefetch = 0 : i64, scratch_operands = 0 : i64, tpu.core_type = #tpu.core_type<tc>} {
    %c0 = arith.constant 0 : index
    %c0_0 = arith.constant 0 : index
    %0 = vector.load %arg0[%c0, %c0_0] : memref<2x32xf32, #tpu.memory_space<vmem>>, vector<2x32xf32>
    %c0_1 = arith.constant 0 : index
    %c0_2 = arith.constant 0 : index
    %1 = vector.load %arg1[%c0_1, %c0_2] : memref<16x32xf32, #tpu.memory_space<vmem>>, vector<16x32xf32>
    %cst = arith.constant dense<0.000000e+00> : vector<2x16xf32>
    %2 = tpu.matmul %0, %1, %cst {dimension_numbers = #tpu.dot_dimension_numbers<[1], [1], [0], [0], [0, 0, 1, 0], [], []>} : vector<2x32xf32>, vector<16x32xf32>, vector<2x16xf32> -> vector<2x16xf32>
    %c0_3 = arith.constant 0 : index
    %c0_4 = arith.constant 0 : index
    %3 = vector.load %arg2[%c0_3, %c0_4] : memref<1x16xf32, #tpu.memory_space<vmem>>, vector<1x16xf32>
    %4 = vector.broadcast %3 : vector<1x16xf32> to vector<2x16xf32>
    %5 = arith.addf %2, %4 : vector<2x16xf32>
    %c0_5 = arith.constant 0 : index
    %c0_6 = arith.constant 0 : index
    %6 = vector.load %arg3[%c0_5, %c0_6] : memref<2x16xf32, #tpu.memory_space<vmem>>, vector<2x16xf32>
    %7 = arith.addf %5, %6 : vector<2x16xf32>
    %cst_7 = arith.constant 0.000000e+00 : f32
    %8 = vector.broadcast %cst_7 : f32 to vector<2x16xf32>
    %9 = arith.maximumf %7, %8 : vector<2x16xf32>
    %c0_8 = arith.constant 0 : index
    %c0_9 = arith.constant 0 : index
    %10 = vector.load %arg4[%c0_8, %c0_9] : memref<2x16xf32, #tpu.memory_space<vmem>>, vector<2x16xf32>
    tpu.vector_store %arg4[%c0_8, %c0_9], %9 {strides = array<i32>} : memref<2x16xf32, #tpu.memory_space<vmem>>, vector<2x16xf32>,
    return
  }
}

</mosaic_0001>

<llo_original>
// kernel: tpu_custom_call.1
$region0: #{tpu_custom_call.1}
  #allocation0 [shape = 'u32[]', space=smem, size = 0x4, offset = 0x4, fixed_abs, tag = 'smem constant byte address 0x4 - core index']
  #allocation1 [shape = 'u32[72,128]{1,0:T(1,128)}', space=vmem, size = 0x9000, scoped, tag = 'internal scratch']
  %s0 = inlined_call_operand.vmem [shape: f32[2,32], index: 0, kind: input, shape index: {}]
  %s1 = inlined_call_operand.hbm [shape: f32[16,32], index: 1, kind: input, shape index: {}]
  %s2 = inlined_call_operand.vmem [shape: f32[1,16], index: 2, kind: input, shape index: {}]
  %s3 = inlined_call_operand.hbm [shape: f32[2,16], index: 3, kind: input, shape index: {}, may-alias: {3,4}]
  %s4 = inlined_call_operand.hbm [shape: f32[2,16], index: 4, kind: output, shape index: {}, may-alias: {3,4}]
  %s5 = sld [smem:[#allocation0]]
  $region34: #{tpu_custom_call.1} parent=0
    _
  %s7 = ssub.s32 1, %s5
  %s8 = scalar_select 0, %s7, %s5
  $region1: #{tpu_custom_call.1} parent=0
    #allocation2 [shape = 'u8[8192]{0}', space=vmem, size = 0x2000, scoped, tag = 'input window, operand 1, single buffered']
    #allocation3 [shape = 's32[1]{0}', space=sflag, size = 0x4, scoped, tag = 'scoped memory for tpu_custom_call.1']
    #allocation4 [shape = 's32[1]{0}', space=sflag, size = 0x4, scoped, tag = 'scoped memory for tpu_custom_call.1']
    #allocation5 [shape = 'u8[1024]{0}', space=vmem, size = 0x400, scoped, tag = 'input window, operand 3, single buffered']
    #allocation6 [shape = 's32[1]{0}', space=sflag, size = 0x4, scoped, tag = 'scoped memory for tpu_custom_call.1']
    #allocation7 [shape = 'u8[1024]{0}', space=vmem, size = 0x400, scoped, tag = 'output window, operand 0, single buffered']
    %9 = vsyncpa [#allocation3], 0
    %10 = vsyncpa [#allocation6], 0
    %11 = vsyncpa [#allocation4], 0
    // Predicated region
    $region2: #{tpu_custom_call.1} parent=1 // pred_check
      _
    $region3: #{tpu_custom_call.1} parent=1 // pred_check_branch
      %13 = sbr.rel (0) target = $region5
    $region4: #{tpu_custom_call.1} parent=1 // pred_region
      _
    $region5: #{tpu_custom_call.1} parent=1 // pred_fallthru
      _
    // Predicated region
    $region6: #{tpu_custom_call.1} parent=1 // pred_check
      _
    $region7: #{tpu_custom_call.1} parent=1 // pred_check_branch
      %15 = sbr.rel (0) target = $region9
    $region8: #{tpu_custom_call.1} parent=1 // pred_region
      %17 = vsyncadd [#allocation3], 0
      %s18 = sshll.u32 %s1, 4
      %s19 = int_to_ptr.hbm [resolvable:$true] %s18
      %s20 = sshll.u32 [#allocation2], 4
      %s21 = int_to_ptr.vmem [resolvable:$true] %s20
      %26 = dma.hbm_to_vmem [thread:$0]  %s19, 256, %s21, [#allocation3], 128, 128, 8
    $region9: #{tpu_custom_call.1} parent=1 // pred_fallthru
      _
    // Predicated region
    $region10: #{tpu_custom_call.1} parent=1 // pred_check
      _
    $region11: #{tpu_custom_call.1} parent=1 // pred_check_branch
      %28 = sbr.rel (0) target = $region13
    $region12: #{tpu_custom_call.1} parent=1 // pred_region
      _
    $region13: #{tpu_custom_call.1} parent=1 // pred_fallthru
      _
    // Predicated region
    $region14: #{tpu_custom_call.1} parent=1 // pred_check
      _
    $region15: #{tpu_custom_call.1} parent=1 // pred_check_branch
      %30 = sbr.rel (0) target = $region17
    $region16: #{tpu_custom_call.1} parent=1 // pred_region
      %32 = vsyncadd [#allocation6], 0
      %s34 = sshll.u32 %s3, 4
      %s35 = int_to_ptr.hbm [resolvable:$true] %s34
      %s36 = sshll.u32 [#allocation5], 4
      %s37 = int_to_ptr.vmem [resolvable:$true] %s36
      %39 = dma.hbm_to_vmem [thread:$0]  %s35, 32, %s37, [#allocation6]
    $region17: #{tpu_custom_call.1} parent=1 // pred_fallthru
      _
    // Predicated region
    $region18: #{tpu_custom_call.1} parent=1 // pred_check
      _
    $region19: #{tpu_custom_call.1} parent=1 // pred_check_branch
      %41 = sbr.rel (0) target = $region21
    $region20: #{tpu_custom_call.1} parent=1 // pred_region
      %43 = dma.done [#allocation3], 256
    $region21: #{tpu_custom_call.1} parent=1 // pred_fallthru
      _
    // Predicated region
    $region22: #{tpu_custom_call.1} parent=1 // pred_check
      _
    $region23: #{tpu_custom_call.1} parent=1 // pred_check_branch
      %45 = sbr.rel (0) target = $region25
    $region24: #{tpu_custom_call.1} parent=1 // pred_region
      %47 = dma.done [#allocation6], 32
    $region25: #{tpu_custom_call.1} parent=1 // pred_fallthru
      _
    %v48 = vld [vmem:[%s0] sm:$0x3]
    %v49 = vld [vmem:[#allocation2] sm:$0xff]
    %v50 = vld [vmem:[#allocation2 + $0x8] sm:$0xff]
    %v51 = vld [vmem:[%s2] sm:$0x1]
    %v53 = vperm.slane %v51, 0
    %vm55 = vcmask 261120
    %v57 = vsel %vm55, %v48, 0
    %v60 = vsel %vm55, %v49, 0
    %v63 = vsel %vm55, %v50, 0
    %65 = vmatpush.xpose.msra.mxu0 0.0
    %66 = vmatpush.xpose.msra.mxu0 0.0
    %67 = vmatpush.xpose.msra.mxu0 0.0
    %68 = vmatpush.xpose.msra.mxu0 0.0
    %69 = vmatpush.xpose.msra.mxu0 0.0
    %70 = vmatpush.xpose.msra.mxu0 0.0
    %71 = vmatpush.xpose.msra.mxu0 0.0
    %72 = vmatpush.xpose.msra.mxu0 0.0
    %73 = vmatpush.xpose.msra.mxu0 0.0
    %74 = vmatpush.xpose.msra.mxu0 0.0
    %75 = vmatpush.xpose.msra.mxu0 0.0
    %76 = vmatpush.xpose.msra.mxu0 0.0
    %77 = vmatpush.xpose.msra.mxu0 0.0
    %78 = vmatpush.xpose.msra.mxu0 0.0
    %79 = vmatpush.xpose.msra.mxu0 %v63
    %80 = vmatpush.xpose.msra.mxu0 %v60
    %81 = vmatmul.f32.gmra.mxu0 %v57
    %v82 = vpop.f32.mrf.mxu0
    %v83 = vadd.f32 %v53, %v82
    %84 = vdwg.mxu0
    %v85 = vld [vmem:[#allocation5] sm:$0x3]
    %v86 = vadd.f32 %v83, %v85
    %v87 = vmax.f32 %v86, 0.0
    %vm88 = vcmask 123904
    %89 = vst.msk [vmem:[#allocation7] sm:$0x3] %vm88, %v87
    // Predicated region
    $region26: #{tpu_custom_call.1} parent=1 // pred_check
      _
    $region27: #{tpu_custom_call.1} parent=1 // pred_check_branch
      %91 = sbr.rel (0) target = $region29
    $region28: #{tpu_custom_call.1} parent=1 // pred_region
      %93 = vsyncadd [#allocation4], 0
      %s95 = sshll.u32 [#allocation7], 4
      %s96 = int_to_ptr.vmem [resolvable:$true] %s95
      %s97 = sshll.u32 %s4, 4
      %s98 = int_to_ptr.hbm [resolvable:$true] %s97
      %100 = dma.vmem_to_hbm [thread:$0]  %s96, 32, %s98, [#allocation4]
    $region29: #{tpu_custom_call.1} parent=1 // pred_fallthru
      _
    // Predicated region
    $region30: #{tpu_custom_call.1} parent=1 // pred_check
      _
    $region31: #{tpu_custom_call.1} parent=1 // pred_check_branch
      %102 = sbr.rel (0) target = $region33
    $region32: #{tpu_custom_call.1} parent=1 // pred_region
      %104 = dma.done [#allocation4], 32
    $region33: #{tpu_custom_call.1} parent=1 // pred_fallthru
      _
    %105 = vsyncpa [#allocation3], 1
    %106 = vsyncpa [#allocation6], 1
    %107 = vsyncpa [#allocation4], 1

</llo_original>
